<compile_context>
chip_gen: v6e
topology: v6e:2x2x1
jax: 0.10.0
libtpu: 0.0.40
codegen_flags: <defaults>
</compile_context>

<pallas_src>
import functools

import jax
import jax.numpy as jnp
from jax.experimental import pallas as pl
from jax.experimental.pallas import tpu as pltpu


def _catbraids_dma_kernel(*refs, plan):
    """refs = (*in_hbm_refs, out_hbm_ref, dma_sems).

    in_hbm_refs[i]: (N, C_i*H*W) flattened braid, left in HBM (memory_space=ANY).
    out_hbm_ref   : (N, C_out*H*W) flattened output, in HBM.
    dma_sems      : DMA semaphore array, one per slab copy.
    plan          : static tuple of (input_index, src_offset, dst_offset, length)
                    describing each contiguous half-channel slab copy.
    """
    *in_refs, out_ref, sems = refs
    copies = []
    for k, (idx, src_off, dst_off, length) in enumerate(plan):
        # Static slices -> strided HBM->HBM DMA: N rows of `length` contiguous
        # elements each.  No VMEM round-trip, no vld/vst work on the VPU.
        cp = pltpu.make_async_copy(
            in_refs[idx].at[:, pl.ds(src_off, length)],
            out_ref.at[:, pl.ds(dst_off, length)],
            sems.at[k],
        )
        cp.start()
        copies.append(cp)
    # All slabs are independent; issue everything, then drain.
    for cp in copies:
        cp.wait()


def _build_slab_plan(channels, hw):
    """Static copy plan: first halves of every braid, then second halves.

    torch.chunk(b, 2, dim=1) gives the first chunk ceil(C/2) channels."""
    firsts = [(c + 1) // 2 for c in channels]
    plan = []
    off = 0
    for i, f in enumerate(firsts):
        plan.append((i, 0, off, f * hw))
        off += f * hw
    for i, (c, f) in enumerate(zip(channels, firsts)):
        sec = c - f
        if sec > 0:
            plan.append((i, f * hw, off, sec * hw))
            off += sec * hw
    return tuple(plan), off


def cat_braids(braids, *, force_pallas=False, min_pallas_bytes=1 << 20):
    """Pallas implementation of CatBraids.forward(braids) for NCHW inputs."""
    n, _, h, w = braids[0].shape
    dtype = braids[0].dtype
    for b in braids:
        assert b.shape[0] == n and b.shape[2:] == (h, w), (
            f"braid shape mismatch: {b.shape} vs N={n}, HW=({h},{w})")
        assert b.dtype == dtype, f"braid dtype mismatch: {b.dtype} vs {dtype}"
        # torch.chunk(b, 2, dim=1) with C < 2 yields a single chunk and the
        # original module would raise on pairs[1]; reject it up front.
        assert b.shape[1] >= 2, f"CatBraids requires >=2 channels, got {b.shape[1]}"

    # Single braid: chunk + cat reassembles the tensor exactly -> identity.
    if len(braids) == 1:
        return braids[0]

    hw = h * w
    channels = [b.shape[1] for b in braids]
    c_out = sum(channels)
    itemsize = jnp.dtype(dtype).itemsize
    plan, flat_out = _build_slab_plan(channels, hw)
    assert flat_out == c_out * hw

    out_bytes = n * flat_out * itemsize
    if not force_pallas and out_bytes < min_pallas_bytes:
        # Sub-MiB tensors: XLA's native slice+concat is already at roofline and
        # avoids the pallas_call fixed cost.
        return cat_braids_reference(braids)

    # Flatten to (N, C_i*H*W); channel halves are contiguous slabs per row.
    flats = [b.reshape(n, c * hw) for b, c in zip(braids, channels)]

    out_flat = pl.pallas_call(
        functools.partial(_catbraids_dma_kernel, plan=plan),
        out_shape=jax.ShapeDtypeStruct((n, flat_out), dtype),
        in_specs=[pl.BlockSpec(memory_space=pl.ANY) for _ in flats],
        out_specs=pl.BlockSpec(memory_space=pl.ANY),
        scratch_shapes=[pltpu.SemaphoreType.DMA((len(plan),))],
        cost_estimate=pl.CostEstimate(
            flops=0,
            transcendentals=0,
            bytes_accessed=2 * out_bytes,  # read everything once, write once
        ),
    )(*flats)

    return out_flat.reshape(n, c_out, h, w)


def cat_braids_reference(braids):
    """Pure-JAX reference mirroring the PyTorch semantics exactly."""
    firsts, seconds = [], []
    for b in braids:
        c = b.shape[1]
        first = (c + 1) // 2  # torch.chunk gives ceil(C/2) to the first chunk
        firsts.append(b[:, :first])
        seconds.append(b[:, first:])
    return jnp.concatenate(firsts + seconds, axis=1)


if __name__ == "__main__":
    key = jax.random.PRNGKey(0)
    k1, k2, k3, k4, k5, k6 = jax.random.split(key, 6)

    # Two braid-form feature maps from PartPool ops: NCHW, small shapes.
    b1 = jax.random.normal(k1, (2, 4, 16, 16), dtype=jnp.float32)
    b2 = jax.random.normal(k2, (2, 4, 16, 16), dtype=jnp.float32)
    braids = [b1, b2]

    out = jax.block_until_ready(cat_braids(braids, force_pallas=True))
    ref = cat_braids_reference(braids)
    assert out.shape == ref.shape, (out.shape, ref.shape)
    assert jnp.array_equal(out, ref), "Pallas CatBraids mismatch vs reference"

    # Larger batch + mixed channel counts (still a handful of slab DMAs).
    big = [
        jax.random.normal(k3, (32, 6, 16, 16), dtype=jnp.float32),
        jax.random.normal(k4, (32, 4, 16, 16), dtype=jnp.float32),
    ]
    out_big = jax.block_until_ready(cat_braids(big, force_pallas=True))
    ref_big = cat_braids_reference(big)
    assert out_big.shape == ref_big.shape
    assert jnp.array_equal(out_big, ref_big), "Pallas CatBraids mismatch (big case)"

    # Odd channel counts exercise the ceil(C/2) chunk split.
    odd = [
        jax.random.normal(k5, (4, 5, 16, 16), dtype=jnp.float32),
        jax.random.normal(k6, (4, 3, 16, 16), dtype=jnp.float32),
    ]
    out_odd = jax.block_until_ready(cat_braids(odd, force_pallas=True))
    ref_odd = cat_braids_reference(odd)
    assert out_odd.shape == ref_odd.shape
    assert jnp.array_equal(out_odd, ref_odd), "Pallas CatBraids mismatch (odd case)"

    print("KERNEL_OK")
</pallas_src>

<mosaic_0001>
module attributes {stable_mosaic.version = 11 : i64} {
  func.func @_catbraids_dma_kernel(%arg0: memref<2x1024xf32, #tpu.memory_space<any>>, %arg1: memref<2x1024xf32, #tpu.memory_space<any>>, %arg2: memref<2x2048xf32, #tpu.memory_space<any>>, %arg3: memref<4x!tpu.dma_semaphore, #tpu.memory_space<semaphore_mem>>) attributes {dimension_semantics = [], scalar_prefetch = 0 : i64, scratch_operands = 1 : i64, tpu.core_type = #tpu.core_type<tc>} {
    %c0_i32 = arith.constant 0 : i32
    %c0_i32_0 = arith.constant 0 : i32
    %c0_i32_1 = arith.constant 0 : i32
    %0 = tpu.memref_slice %arg0[%c0_i32_0, %c0_i32_1] : memref<2x1024xf32, #tpu.memory_space<any>> -> memref<2x512xf32, #tpu.memory_space<any>>
    %c0_i32_2 = arith.constant 0 : i32
    %c0_i32_3 = arith.constant 0 : i32
    %1 = tpu.memref_slice %arg2[%c0_i32_2, %c0_i32_3] : memref<2x2048xf32, #tpu.memory_space<any>> -> memref<2x512xf32, #tpu.memory_space<any>>
    %2 = tpu.memref_slice %arg3[%c0_i32] : memref<4x!tpu.dma_semaphore, #tpu.memory_space<semaphore_mem>> -> memref<1x!tpu.dma_semaphore, #tpu.memory_space<semaphore_mem>>
    %3 = tpu.memref_squeeze %2 : memref<1x!tpu.dma_semaphore, #tpu.memory_space<semaphore_mem>> -> memref<!tpu.dma_semaphore, #tpu.memory_space<semaphore_mem>>
    tpu.enqueue_dma source(%0 : memref<2x512xf32, #tpu.memory_space<any>>) target(%1 : memref<2x512xf32, #tpu.memory_space<any>>) target_semaphore(%3 : memref<!tpu.dma_semaphore, #tpu.memory_space<semaphore_mem>>)
    %c1_i32 = arith.constant 1 : i32
    %c0_i32_4 = arith.constant 0 : i32
    %c0_i32_5 = arith.constant 0 : i32
    %4 = tpu.memref_slice %arg1[%c0_i32_4, %c0_i32_5] : memref<2x1024xf32, #tpu.memory_space<any>> -> memref<2x512xf32, #tpu.memory_space<any>>
    %c0_i32_6 = arith.constant 0 : i32
    %c512_i32 = arith.constant 512 : i32
    %5 = tpu.memref_slice %arg2[%c0_i32_6, %c512_i32] : memref<2x2048xf32, #tpu.memory_space<any>> -> memref<2x512xf32, #tpu.memory_space<any>>
    %6 = tpu.memref_slice %arg3[%c1_i32] : memref<4x!tpu.dma_semaphore, #tpu.memory_space<semaphore_mem>> -> memref<1x!tpu.dma_semaphore, #tpu.memory_space<semaphore_mem>>
    %7 = tpu.memref_squeeze %6 : memref<1x!tpu.dma_semaphore, #tpu.memory_space<semaphore_mem>> -> memref<!tpu.dma_semaphore, #tpu.memory_space<semaphore_mem>>
    tpu.enqueue_dma source(%4 : memref<2x512xf32, #tpu.memory_space<any>>) target(%5 : memref<2x512xf32, #tpu.memory_space<any>>) target_semaphore(%7 : memref<!tpu.dma_semaphore, #tpu.memory_space<semaphore_mem>>)
    %c2_i32 = arith.constant 2 : i32
    %c0_i32_7 = arith.constant 0 : i32
    %c512_i32_8 = arith.constant 512 : i32
    %8 = tpu.memref_slice %arg0[%c0_i32_7, %c512_i32_8] : memref<2x1024xf32, #tpu.memory_space<any>> -> memref<2x512xf32, #tpu.memory_space<any>>
    %c0_i32_9 = arith.constant 0 : i32
    %c1024_i32 = arith.constant 1024 : i32
    %9 = tpu.memref_slice %arg2[%c0_i32_9, %c1024_i32] : memref<2x2048xf32, #tpu.memory_space<any>> -> memref<2x512xf32, #tpu.memory_space<any>>
    %10 = tpu.memref_slice %arg3[%c2_i32] : memref<4x!tpu.dma_semaphore, #tpu.memory_space<semaphore_mem>> -> memref<1x!tpu.dma_semaphore, #tpu.memory_space<semaphore_mem>>
    %11 = tpu.memref_squeeze %10 : memref<1x!tpu.dma_semaphore, #tpu.memory_space<semaphore_mem>> -> memref<!tpu.dma_semaphore, #tpu.memory_space<semaphore_mem>>
    tpu.enqueue_dma source(%8 : memref<2x512xf32, #tpu.memory_space<any>>) target(%9 : memref<2x512xf32, #tpu.memory_space<any>>) target_semaphore(%11 : memref<!tpu.dma_semaphore, #tpu.memory_space<semaphore_mem>>)
    %c3_i32 = arith.constant 3 : i32
    %c0_i32_10 = arith.constant 0 : i32
    %c512_i32_11 = arith.constant 512 : i32
    %12 = tpu.memref_slice %arg1[%c0_i32_10, %c512_i32_11] : memref<2x1024xf32, #tpu.memory_space<any>> -> memref<2x512xf32, #tpu.memory_space<any>>
    %c0_i32_12 = arith.constant 0 : i32
    %c1536_i32 = arith.constant 1536 : i32
    %13 = tpu.memref_slice %arg2[%c0_i32_12, %c1536_i32] : memref<2x2048xf32, #tpu.memory_space<any>> -> memref<2x512xf32, #tpu.memory_space<any>>
    %14 = tpu.memref_slice %arg3[%c3_i32] : memref<4x!tpu.dma_semaphore, #tpu.memory_space<semaphore_mem>> -> memref<1x!tpu.dma_semaphore, #tpu.memory_space<semaphore_mem>>
    %15 = tpu.memref_squeeze %14 : memref<1x!tpu.dma_semaphore, #tpu.memory_space<semaphore_mem>> -> memref<!tpu.dma_semaphore, #tpu.memory_space<semaphore_mem>>
    tpu.enqueue_dma source(%12 : memref<2x512xf32, #tpu.memory_space<any>>) target(%13 : memref<2x512xf32, #tpu.memory_space<any>>) target_semaphore(%15 : memref<!tpu.dma_semaphore, #tpu.memory_space<semaphore_mem>>)
    %c0_i32_13 = arith.constant 0 : i32
    %c0_i32_14 = arith.constant 0 : i32
    %c0_i32_15 = arith.constant 0 : i32
    %16 = tpu.memref_slice %arg0[%c0_i32_14, %c0_i32_15] : memref<2x1024xf32, #tpu.memory_space<any>> -> memref<2x512xf32, #tpu.memory_space<any>>
    %c0_i32_16 = arith.constant 0 : i32
    %c0_i32_17 = arith.constant 0 : i32
    %17 = tpu.memref_slice %arg2[%c0_i32_16, %c0_i32_17] : memref<2x2048xf32, #tpu.memory_space<any>> -> memref<2x512xf32, #tpu.memory_space<any>>
    %18 = tpu.memref_slice %arg3[%c0_i32_13] : memref<4x!tpu.dma_semaphore, #tpu.memory_space<semaphore_mem>> -> memref<1x!tpu.dma_semaphore, #tpu.memory_space<semaphore_mem>>
    %19 = tpu.memref_squeeze %18 : memref<1x!tpu.dma_semaphore, #tpu.memory_space<semaphore_mem>> -> memref<!tpu.dma_semaphore, #tpu.memory_space<semaphore_mem>>
    tpu.wait_dma2 semaphore(%19 : memref<!tpu.dma_semaphore, #tpu.memory_space<semaphore_mem>>) src(%16 : memref<2x512xf32, #tpu.memory_space<any>>) dst(%17 : memref<2x512xf32, #tpu.memory_space<any>>)
    %c1_i32_18 = arith.constant 1 : i32
    %c0_i32_19 = arith.constant 0 : i32
    %c0_i32_20 = arith.constant 0 : i32
    %20 = tpu.memref_slice %arg1[%c0_i32_19, %c0_i32_20] : memref<2x1024xf32, #tpu.memory_space<any>> -> memref<2x512xf32, #tpu.memory_space<any>>
    %c0_i32_21 = arith.constant 0 : i32
    %c512_i32_22 = arith.constant 512 : i32
    %21 = tpu.memref_slice %arg2[%c0_i32_21, %c512_i32_22] : memref<2x2048xf32, #tpu.memory_space<any>> -> memref<2x512xf32, #tpu.memory_space<any>>
    %22 = tpu.memref_slice %arg3[%c1_i32_18] : memref<4x!tpu.dma_semaphore, #tpu.memory_space<semaphore_mem>> -> memref<1x!tpu.dma_semaphore, #tpu.memory_space<semaphore_mem>>
    %23 = tpu.memref_squeeze %22 : memref<1x!tpu.dma_semaphore, #tpu.memory_space<semaphore_mem>> -> memref<!tpu.dma_semaphore, #tpu.memory_space<semaphore_mem>>
    tpu.wait_dma2 semaphore(%23 : memref<!tpu.dma_semaphore, #tpu.memory_space<semaphore_mem>>) src(%20 : memref<2x512xf32, #tpu.memory_space<any>>) dst(%21 : memref<2x512xf32, #tpu.memory_space<any>>)
    %c2_i32_23 = arith.constant 2 : i32
    %c0_i32_24 = arith.constant 0 : i32
    %c512_i32_25 = arith.constant 512 : i32
    %24 = tpu.memref_slice %arg0[%c0_i32_24, %c512_i32_25] : memref<2x1024xf32, #tpu.memory_space<any>> -> memref<2x512xf32, #tpu.memory_space<any>>
    %c0_i32_26 = arith.constant 0 : i32
    %c1024_i32_27 = arith.constant 1024 : i32
    %25 = tpu.memref_slice %arg2[%c0_i32_26, %c1024_i32_27] : memref<2x2048xf32, #tpu.memory_space<any>> -> memref<2x512xf32, #tpu.memory_space<any>>
    %26 = tpu.memref_slice %arg3[%c2_i32_23] : memref<4x!tpu.dma_semaphore, #tpu.memory_space<semaphore_mem>> -> memref<1x!tpu.dma_semaphore, #tpu.memory_space<semaphore_mem>>
    %27 = tpu.memref_squeeze %26 : memref<1x!tpu.dma_semaphore, #tpu.memory_space<semaphore_mem>> -> memref<!tpu.dma_semaphore, #tpu.memory_space<semaphore_mem>>
    tpu.wait_dma2 semaphore(%27 : memref<!tpu.dma_semaphore, #tpu.memory_space<semaphore_mem>>) src(%24 : memref<2x512xf32, #tpu.memory_space<any>>) dst(%25 : memref<2x512xf32, #tpu.memory_space<any>>)
    %c3_i32_28 = arith.constant 3 : i32
    %c0_i32_29 = arith.constant 0 : i32
    %c512_i32_30 = arith.constant 512 : i32
    %28 = tpu.memref_slice %arg1[%c0_i32_29, %c512_i32_30] : memref<2x1024xf32, #tpu.memory_space<any>> -> memref<2x512xf32, #tpu.memory_space<any>>
    %c0_i32_31 = arith.constant 0 : i32
    %c1536_i32_32 = arith.constant 1536 : i32
    %29 = tpu.memref_slice %arg2[%c0_i32_31, %c1536_i32_32] : memref<2x2048xf32, #tpu.memory_space<any>> -> memref<2x512xf32, #tpu.memory_space<any>>
    %30 = tpu.memref_slice %arg3[%c3_i32_28] : memref<4x!tpu.dma_semaphore, #tpu.memory_space<semaphore_mem>> -> memref<1x!tpu.dma_semaphore, #tpu.memory_space<semaphore_mem>>
    %31 = tpu.memref_squeeze %30 : memref<1x!tpu.dma_semaphore, #tpu.memory_space<semaphore_mem>> -> memref<!tpu.dma_semaphore, #tpu.memory_space<semaphore_mem>>
    tpu.wait_dma2 semaphore(%31 : memref<!tpu.dma_semaphore, #tpu.memory_space<semaphore_mem>>) src(%28 : memref<2x512xf32, #tpu.memory_space<any>>) dst(%29 : memref<2x512xf32, #tpu.memory_space<any>>)
    return
  }
}

</mosaic_0001>

<llo_original>
// kernel: tpu_custom_call.1
$region0: #{tpu_custom_call.1}
  #allocation0 [shape = 'u32[]', space=smem, size = 0x4, offset = 0x4, fixed_abs, tag = 'smem constant byte address 0x4 - core index']
  #allocation1 [shape = 'u32[144,128]{1,0:T(1,128)}', space=vmem, size = 0x12000, scoped, tag = 'internal scratch']
  #allocation2 [shape = 's32[4]{0}', space=sflag, size = 0x10, scoped, tag = 'scratch operand']
  #allocation3 [shape = 's32[]', space=sflag, size = 0x4, offset = 0, fixed_abs, tag = 'sflag constant byte address 0x0 - dummy sync flag']
  #allocation4 [shape = 'u32[0]{0}', space=smem, size = 0, offset = 0, fixed_abs, tag = 'smem constant byte address 0x0 - null']
  #allocation5 [shape = 's32[]', space=sflag, size = 0x4, offset = 0, fixed_abs, tag = 'sflag constant byte address 0x0 - dummy sync flag']
  #allocation6 [shape = 'u32[0]{0}', space=smem, size = 0, offset = 0, fixed_abs, tag = 'smem constant byte address 0x0 - null']
  #allocation7 [shape = 's32[]', space=sflag, size = 0x4, offset = 0, fixed_abs, tag = 'sflag constant byte address 0x0 - dummy sync flag']
  #allocation8 [shape = 'u32[0]{0}', space=smem, size = 0, offset = 0, fixed_abs, tag = 'smem constant byte address 0x0 - null']
  #allocation9 [shape = 's32[]', space=sflag, size = 0x4, offset = 0, fixed_abs, tag = 'sflag constant byte address 0x0 - dummy sync flag']
  #allocation10 [shape = 'u32[0]{0}', space=smem, size = 0, offset = 0, fixed_abs, tag = 'smem constant byte address 0x0 - null']
  %s0 = inlined_call_operand.hbm [shape: f32[2,1024], index: 0, kind: input, shape index: {}]
  %s1 = inlined_call_operand.hbm [shape: f32[2,1024], index: 1, kind: input, shape index: {}]
  %s2 = inlined_call_operand.hbm [shape: f32[2,2048], index: 2, kind: output, shape index: {}]
  %s3 = sld [smem:[#allocation0]]
  $region2: #{tpu_custom_call.1} parent=0
    _
  %s5 = ssub.s32 1, %s3
  %s6 = scalar_select 0, %s5, %s3
  %s8 = sshll.u32 1, 14
  %s9 = sxor.u32 4294967295, %s8
  %13 = dma.general %s0, 128, %s2, [#allocation2], 131072, [#allocation4], 0, 0
  %s14 = scalar_lea.hbm %s2, 128
  %s15 = scalar_lea.sflag [#allocation2], 1
  %s17 = sshll.u32 1, 14
  %s18 = sxor.u32 4294967295, %s17
  %22 = dma.general %s1, 128, %s14, %s15, 131072, [#allocation6], 0, 0
  %s23 = scalar_lea.hbm %s0, 128
  %s24 = scalar_lea.hbm %s2, 256
  %s25 = scalar_lea.sflag [#allocation2], 2
  %s27 = sshll.u32 1, 14
  %s28 = sxor.u32 4294967295, %s27
  %32 = dma.general %s23, 128, %s24, %s25, 131072, [#allocation8], 0, 0
  %s33 = scalar_lea.hbm %s1, 128
  %s34 = scalar_lea.hbm %s2, 384
  %s35 = scalar_lea.sflag [#allocation2], 3
  %s37 = sshll.u32 1, 14
  %s38 = sxor.u32 4294967295, %s37
  %42 = dma.general %s33, 128, %s34, %s35, 131072, [#allocation10], 0, 0
  %s43 = smul.u32 2, 1
  %s44 = smul.u32 %s43, 4
  %s45 = sshll.u32 %s44, 4
  %46 = dma.done [#allocation2], %s45
  %s47 = sshll.u32 %s44, 4
  %48 = dma.done %s15, %s47
  %s49 = sshll.u32 %s44, 4
  %50 = dma.done %s25, %s49
  %s51 = sshll.u32 %s44, 4
  %52 = dma.done %s35, %s51
  %53 = vsyncmov [#allocation2]
  %s54 = vpop.sfrf %53
  %p55 = scmp.eq.s32.totalorder %s54, 0
  %p56 = pneg %p55
  %58 = shalt.err (%p56)
  %s59 = scalar_lea.sflag [#allocation2], 1
  %60 = vsyncmov %s59
  %s61 = vpop.sfrf %60
  %p62 = scmp.eq.s32.totalorder %s61, 0
  %p63 = pneg %p62
  %65 = shalt.err (%p63)
  %s66 = scalar_lea.sflag [#allocation2], 2
  %67 = vsyncmov %s66
  %s68 = vpop.sfrf %67
  %p69 = scmp.eq.s32.totalorder %s68, 0
  %p70 = pneg %p69
  %72 = shalt.err (%p70)
  %s73 = scalar_lea.sflag [#allocation2], 3
  %74 = vsyncmov %s73
  %s75 = vpop.sfrf %74
  %p76 = scmp.eq.s32.totalorder %s75, 0
  %p77 = pneg %p76
  %79 = shalt.err (%p77)

</llo_original>
